<compile_context>
chip_gen: v7x
topology: tpu7x:2x2x1
jax: 0.10.0
libtpu: 0.0.40
codegen_flags: <defaults>
</compile_context>

<pallas_src>
import functools
import math

import jax
import jax.numpy as jnp
from jax.experimental import pallas as pl
from jax.experimental.pallas import tpu as pltpu


_VMEM_LIMIT_BYTES = 48 * 1024 * 1024  # > default scoped limit, < v7x physical (64 MiB)


def _pick_tile(n, candidates=(512, 256, 128)):
    for c in candidates:
        if n % c == 0:
            return c
    return n


# ---------------------------------------------------------------------------
# Kernels
# ---------------------------------------------------------------------------

def _linear_kernel(x_ref, w_ref, o_ref, *, compute_dtype):
    """o = x @ w for one (1, ts, Din) row block; `w` is pre-transposed (Din, Dout)."""
    x = x_ref[0].astype(compute_dtype)                 # (ts, Din)
    w = w_ref[...].astype(compute_dtype)               # (Din, Dout)
    o_ref[0] = jnp.dot(x, w, preferred_element_type=jnp.float32).astype(o_ref.dtype)


def _flash_attn_kernel(*refs, causal, compute_dtype):
    """Head-batched flash attention with online softmax.

    grid = (batch, q_tiles, kv_tiles); kv axis is the reduction ("arbitrary").
      q_ref          (1, h, tq, d_k)   (1/sqrt(d_k) already folded into Wq)
      k_ref, v_ref   (1, h, tk, d_k)
      mask_ref       (1, tq, tk) int8  (only when causal=False; nonzero = keep)
      o_ref          (1, h, tq, d_k)
      m_sc, l_sc     (h, tq, 1)  f32   running max / denominator
      acc_sc         (h, tq, d_k) f32  running numerator
    """
    if causal:
        q_ref, k_ref, v_ref, o_ref, m_sc, l_sc, acc_sc = refs
        mask_ref = None
    else:
        q_ref, k_ref, v_ref, mask_ref, o_ref, m_sc, l_sc, acc_sc = refs

    ki = pl.program_id(2)
    nk = pl.num_programs(2)

    @pl.when(ki == 0)
    def _():
        m_sc[...] = jnp.full(m_sc.shape, -jnp.inf, jnp.float32)
        l_sc[...] = jnp.zeros(l_sc.shape, jnp.float32)
        acc_sc[...] = jnp.zeros(acc_sc.shape, jnp.float32)

    q = q_ref[0].astype(compute_dtype)                 # (h, tq, d_k)
    k = k_ref[0].astype(compute_dtype)                 # (h, tk, d_k)
    v = v_ref[0].astype(compute_dtype)                 # (h, tk, d_k)

    # All heads in one batched MXU contraction; accumulate in f32.
    s = jnp.einsum('hqd,hkd->hqk', q, k,
                   preferred_element_type=jnp.float32)  # (h, tq, tk)

    tq, tk = s.shape[1], s.shape[2]
    if causal:
        row = pl.program_id(1) * tq + jax.lax.broadcasted_iota(jnp.int32, (tq, tk), 0)
        col = ki * tk + jax.lax.broadcasted_iota(jnp.int32, (tq, tk), 1)
        keep = col <= row
    else:
        keep = mask_ref[0] != 0                         # (tq, tk)
    s = jnp.where(keep[None, :, :], s, jnp.float32(-1e9))

    m_prev = m_sc[...]
    m_new = jnp.maximum(m_prev, jnp.max(s, axis=-1, keepdims=True))
    corr = jnp.exp(m_prev - m_new)
    p = jnp.exp(s - m_new)                              # f32
    l_sc[...] = corr * l_sc[...] + jnp.sum(p, axis=-1, keepdims=True)
    acc_sc[...] = corr * acc_sc[...] + jnp.einsum(
        'hqk,hkd->hqd', p.astype(compute_dtype), v,
        preferred_element_type=jnp.float32)
    m_sc[...] = m_new

    @pl.when(ki == nk - 1)
    def _():
        inv_l = pl.reciprocal(l_sc[...], approx=True)   # EUP; O(h*tq) not O(tq*tk)
        o_ref[0] = (acc_sc[...] * inv_l).astype(o_ref.dtype)


def _layer_norm_kernel(x_ref, alpha_ref, bias_ref, o_ref, *, eps):
    """PyTorch LayerNormalization: alpha * (x - mean) / (std + eps) + bias,
    with torch's unbiased std (Bessel correction)."""
    x = x_ref[0].astype(jnp.float32)                    # (ts, D)
    d = x.shape[-1]
    mean = jnp.mean(x, axis=-1, keepdims=True)
    centered = x - mean
    var = jnp.sum(centered * centered, axis=-1, keepdims=True) / (d - 1)
    y = alpha_ref[...] * centered / (jnp.sqrt(var) + eps) + bias_ref[...]
    o_ref[0] = y.astype(o_ref.dtype)


# ---------------------------------------------------------------------------
# Wrappers
# ---------------------------------------------------------------------------

def _row_linear(x, w_t, *, out_dtype, compute_dtype):
    """y[b] = x[b] @ w_t, tiled over (batch, seq-tile)."""
    B, S, Din = x.shape
    Dout = w_t.shape[1]
    ts = _pick_tile(S)
    return pl.pallas_call(
        functools.partial(_linear_kernel, compute_dtype=compute_dtype),
        out_shape=jax.ShapeDtypeStruct((B, S, Dout), out_dtype),
        grid_spec=pltpu.PrefetchScalarGridSpec(
            num_scalar_prefetch=0,
            grid=(B, S // ts),
            in_specs=[pl.BlockSpec((1, ts, Din), lambda b, si: (b, si, 0)),
                      pl.BlockSpec((Din, Dout), lambda b, si: (0, 0))],
            out_specs=pl.BlockSpec((1, ts, Dout), lambda b, si: (b, si, 0))),
        compiler_params=pltpu.CompilerParams(
            dimension_semantics=("parallel", "parallel"),
            vmem_limit_bytes=_VMEM_LIMIT_BYTES),
    )(x, w_t)


def multi_head_attention_block(x, mask, wq, wk, wv, wo, *, h,
                               causal=False, compute_dtype=jnp.bfloat16):
    """Fused multi-head self-attention: softmax(QK^T/sqrt(d_k), mask) V Wo^T.

    x: (B, S, D); mask: (S, S) or (B, S, S), nonzero = keep (ignored when
    causal=True and regenerated in-kernel); wq/wk/wv/wo: (D, D) nn.Linear
    weights (out, in). Dropout is identity (eval).
    """
    B, S, D = x.shape
    assert D % h == 0
    d_k = D // h

    # Wrapper-side weight plumbing (free layout work, done once):
    #   pre-transpose all weights, fuse QKV into one (D, 3D) matmul, and fold
    #   the 1/sqrt(d_k) softmax scale into Wq.
    scale = 1.0 / math.sqrt(d_k)
    w_qkv_t = jnp.concatenate(
        [(wq * scale).T, wk.T, wv.T], axis=1).astype(compute_dtype)   # (D, 3D)
    wo_t = wo.T.astype(compute_dtype)                                  # (D, D)

    # 1) QKV projection: its own pallas_call, once per (batch, seq tile).
    qkv = _row_linear(x, w_qkv_t, out_dtype=compute_dtype,
                      compute_dtype=compute_dtype)                     # (B, S, 3D)

    # Head-major layout for head-batched attention (wrapper layout plumbing).
    def to_heads(t):
        return t.reshape(B, S, h, d_k).transpose(0, 2, 1, 3)           # (B, h, S, d_k)

    qh = to_heads(qkv[..., :D])
    kh = to_heads(qkv[..., D:2 * D])
    vh = to_heads(qkv[..., 2 * D:])

    # 2) Flash attention over (batch, q_tile, kv_tile).
    tq = _pick_tile(S, (256, 128))
    tk = _pick_tile(S, (256, 128))
    grid = (B, S // tq, S // tk)

    in_specs = [pl.BlockSpec((1, h, tq, d_k), lambda b, qi, ki: (b, 0, qi, 0)),
                pl.BlockSpec((1, h, tk, d_k), lambda b, qi, ki: (b, 0, ki, 0)),
                pl.BlockSpec((1, h, tk, d_k), lambda b, qi, ki: (b, 0, ki, 0))]
    inputs = [qh, kh, vh]
    if not causal:
        if mask is None:
            raise ValueError("mask is required when causal=False")
        m = mask if mask.ndim == 3 else mask[None]
        m = (m != 0).astype(jnp.int8)              # int8 mask: 4x less DMA than int32
        if m.shape[0] == 1:
            in_specs.append(pl.BlockSpec((1, tq, tk), lambda b, qi, ki: (0, qi, ki)))
        else:
            in_specs.append(pl.BlockSpec((1, tq, tk), lambda b, qi, ki: (b, qi, ki)))
        inputs.append(m)

    oh = pl.pallas_call(
        functools.partial(_flash_attn_kernel, causal=causal,
                          compute_dtype=compute_dtype),
        out_shape=jax.ShapeDtypeStruct((B, h, S, d_k), compute_dtype),
        grid_spec=pltpu.PrefetchScalarGridSpec(
            num_scalar_prefetch=0,
            grid=grid,
            in_specs=in_specs,
            out_specs=pl.BlockSpec((1, h, tq, d_k), lambda b, qi, ki: (b, 0, qi, 0)),
            scratch_shapes=[pltpu.VMEM((h, tq, 1), jnp.float32),
                            pltpu.VMEM((h, tq, 1), jnp.float32),
                            pltpu.VMEM((h, tq, d_k), jnp.float32)]),
        compiler_params=pltpu.CompilerParams(
            dimension_semantics=("parallel", "parallel", "arbitrary"),
            vmem_limit_bytes=_VMEM_LIMIT_BYTES),
    )(*inputs)

    # 3) Output projection on the lane-dense (B, S, D) concatenated-head slab.
    concat = oh.transpose(0, 2, 1, 3).reshape(B, S, D)
    return _row_linear(concat, wo_t, out_dtype=x.dtype, compute_dtype=compute_dtype)


def layer_normalization(x, alpha, bias, *, eps=1e-6):
    """Pallas kernel for the LayerNormalization dependent class."""
    B, S, D = x.shape
    ts = _pick_tile(S)
    return pl.pallas_call(
        functools.partial(_layer_norm_kernel, eps=eps),
        out_shape=jax.ShapeDtypeStruct((B, S, D), x.dtype),
        grid_spec=pltpu.PrefetchScalarGridSpec(
            num_scalar_prefetch=0,
            grid=(B, S // ts),
            in_specs=[pl.BlockSpec((1, ts, D), lambda b, si: (b, si, 0)),
                      pl.BlockSpec((1, D), lambda b, si: (0, 0)),
                      pl.BlockSpec((1, D), lambda b, si: (0, 0))],
            out_specs=pl.BlockSpec((1, ts, D), lambda b, si: (b, si, 0))),
        compiler_params=pltpu.CompilerParams(
            dimension_semantics=("parallel", "parallel"),
            vmem_limit_bytes=_VMEM_LIMIT_BYTES),
    )(x, alpha.reshape(1, D), bias.reshape(1, D))


def encoder_forward(x, mask, layer_params, *, h,
                    causal=False, compute_dtype=jnp.bfloat16):
    """Encoder.forward: `for layer in layers: x = layer(x, mask); return x`.

    Each layer is a multi-head self-attention block.  Note: the given Encoder
    constructs `self.norm` but its forward() returns x without applying it, so
    no final norm is chained here (see `layer_normalization` for the kernel).
    """
    for (wq, wk, wv, wo) in layer_params:
        x = multi_head_attention_block(x, mask, wq, wk, wv, wo, h=h,
                                       causal=causal, compute_dtype=compute_dtype)
    return x


# ---------------------------------------------------------------------------
# Pure-JAX references
# ---------------------------------------------------------------------------

def _mha_reference(x, mask, wq, wk, wv, wo, h):
    B, S, D = x.shape
    d_k = D // h

    def to_heads(t):
        return t.reshape(B, S, h, d_k).transpose(0, 2, 1, 3)

    Q = to_heads(x @ wq.T)
    K = to_heads(x @ wk.T)
    V = to_heads(x @ wv.T)
    scores = Q @ jnp.swapaxes(K, -1, -2) / math.sqrt(d_k)
    m = mask if mask.ndim == 3 else mask[None]
    scores = jnp.where(m[:, None, :, :] == 0, -1e9, scores)
    attn = jax.nn.softmax(scores, axis=-1)
    ctx = (attn @ V).transpose(0, 2, 1, 3).reshape(B, S, D)
    return ctx @ wo.T


def _encoder_reference(x, mask, layer_params, h):
    for (wq, wk, wv, wo) in layer_params:
        x = _mha_reference(x, mask, wq, wk, wv, wo, h)
    return x


# ---------------------------------------------------------------------------
# Demo / self-check
# ---------------------------------------------------------------------------

if __name__ == "__main__":
    B, S, D, H, L = 2, 8, 32, 4, 2

    key = jax.random.PRNGKey(0)
    key, kx = jax.random.split(key)
    x = jax.random.normal(kx, (B, S, D), jnp.float32)

    # Causal mask (1 = keep, 0 = masked), as the module's caller would build it.
    mask = jnp.broadcast_to(jnp.tril(jnp.ones((S, S), jnp.int32))[None], (B, S, S))

    bound = 1.0 / math.sqrt(D)
    layer_params = []
    for _ in range(L):
        key, k1, k2, k3, k4 = jax.random.split(key, 5)
        layer_params.append(tuple(
            jax.random.uniform(kk, (D, D), jnp.float32, -bound, bound)
            for kk in (k1, k2, k3, k4)))

    key, ka, kb = jax.random.split(key, 3)
    ln_alpha = 1.0 + 0.1 * jax.random.normal(ka, (D,), jnp.float32)
    ln_bias = 0.1 * jax.random.normal(kb, (D,), jnp.float32)

    ref = _encoder_reference(x, mask, layer_params, H)

    # 1) f32 compute, causal mask generated in-kernel (no mask DMA).
    out_f32 = encoder_forward(x, mask, layer_params, h=H,
                              causal=True, compute_dtype=jnp.float32)
    out_f32 = jax.block_until_ready(out_f32)
    assert out_f32.shape == (B, S, D)
    assert jnp.allclose(out_f32, ref, atol=5e-3, rtol=5e-3), "f32/causal mismatch"

    # 2) bf16 MXU operands, general (tiled int8) mask path.
    out_bf16 = encoder_forward(x, mask, layer_params, h=H,
                               causal=False, compute_dtype=jnp.bfloat16)
    out_bf16 = jax.block_until_ready(out_bf16)
    assert jnp.allclose(out_bf16, ref, atol=5e-2, rtol=5e-2), "bf16/masked mismatch"

    # 3) LayerNormalization kernel (constructed by Encoder; forward() as
    #    specified returns x without applying it, so it is verified separately).
    ln = jax.block_until_ready(layer_normalization(out_f32, ln_alpha, ln_bias))
    mean = jnp.mean(out_f32, axis=-1, keepdims=True)
    std = jnp.std(out_f32, axis=-1, keepdims=True, ddof=1)
    ln_ref = ln_alpha * (out_f32 - mean) / (std + 1e-6) + ln_bias
    assert jnp.allclose(ln, ln_ref, atol=1e-4, rtol=1e-4), "layernorm mismatch"

    print("KERNEL_OK")
</pallas_src>

<mosaic_0001>
module attributes {stable_mosaic.version = 11 : i64} {
  func.func @_linear_kernel(%arg0: i32, %arg1: i32, %arg2: memref<1x8x32xf32, #tpu.memory_space<vmem>>, %arg3: memref<32x96xf32, #tpu.memory_space<vmem>>, %arg4: memref<1x8x96xf32, #tpu.memory_space<vmem>>) attributes {dimension_semantics = [#tpu.dimension_semantics<parallel>, #tpu.dimension_semantics<parallel>], iteration_bounds = array<i64: 2, 1>, scalar_prefetch = 0 : i64, scratch_operands = 0 : i64, tpu.core_type = #tpu.core_type<tc>, window_params = [{transform_indices = @transform_0, window_bounds = array<i64: 1, 8, 32>}, {pipeline_mode = #tpu.pipeline_mode<synchronous>, transform_indices = @transform_1, window_bounds = array<i64: 32, 96>}, {transform_indices = @transform_2, window_bounds = array<i64: 1, 8, 96>}]} {
    %c0 = arith.constant 0 : index
    %c0_0 = arith.constant 0 : index
    %c0_1 = arith.constant 0 : index
    %0 = vector.load %arg2[%c0, %c0_0, %c0_1] : memref<1x8x32xf32, #tpu.memory_space<vmem>>, vector<1x8x32xf32>
    %1 = vector.shape_cast %0 : vector<1x8x32xf32> to vector<8x32xf32>
    %c0_2 = arith.constant 0 : index
    %c0_3 = arith.constant 0 : index
    %2 = vector.load %arg3[%c0_2, %c0_3] : memref<32x96xf32, #tpu.memory_space<vmem>>, vector<32x96xf32>
    %cst = arith.constant dense<0.000000e+00> : vector<8x96xf32>
    %3 = tpu.matmul %1, %2, %cst {dimension_numbers = #tpu.dot_dimension_numbers<[1], [0], [0], [1], [0, 0, 1, 1], [], []>} : vector<8x32xf32>, vector<32x96xf32>, vector<8x96xf32> -> vector<8x96xf32>
    %c0_4 = arith.constant 0 : index
    %c0_5 = arith.constant 0 : index
    %c0_6 = arith.constant 0 : index
    %4 = vector.load %arg4[%c0_4, %c0_5, %c0_6] : memref<1x8x96xf32, #tpu.memory_space<vmem>>, vector<1x8x96xf32>
    %5 = vector.shape_cast %4 : vector<1x8x96xf32> to vector<8x96xf32>
    %6 = vector.shape_cast %3 : vector<8x96xf32> to vector<1x8x96xf32>
    tpu.vector_store %arg4[%c0_4, %c0_5, %c0_6], %6 {strides = array<i32>} : memref<1x8x96xf32, #tpu.memory_space<vmem>>, vector<1x8x96xf32>,
    return
  }
  func.func @transform_0(%arg0: i32, %arg1: i32) -> (i32, i32, i32) {
    %c0_i32 = arith.constant 0 : i32
    %c0_i32_0 = arith.constant 0 : i32
    return %arg0, %arg1, %c0_i32 : i32, i32, i32
  }
  func.func @transform_1(%arg0: i32, %arg1: i32) -> (i32, i32) {
    %c0_i32 = arith.constant 0 : i32
    %c0_i32_0 = arith.constant 0 : i32
    %c0_i32_1 = arith.constant 0 : i32
    return %c0_i32, %c0_i32_0 : i32, i32
  }
  func.func @transform_2(%arg0: i32, %arg1: i32) -> (i32, i32, i32) {
    %c0_i32 = arith.constant 0 : i32
    %c0_i32_0 = arith.constant 0 : i32
    return %arg0, %arg1, %c0_i32 : i32, i32, i32
  }
}

</mosaic_0001>

<llo_original>
// kernel: tpu_custom_call.1
$region0: #{tpu_custom_call.1}
  #allocation0 [shape = 'u32[]', space=smem, size = 0x4, offset = 0x4, fixed_abs, tag = 'smem constant byte address 0x4 - core index']
  #allocation1 [shape = 'u32[144,128]{1,0:T(1,128)}', space=vmem, size = 0x12000, scoped, tag = 'internal scratch']
  %s0 = inlined_call_operand.hbm [shape: f32[2,8,32], index: 0, kind: input, shape index: {}]
  %s1 = inlined_call_operand.hbm [shape: f32[32,96], index: 1, kind: input, shape index: {}]
  %s2 = inlined_call_operand.hbm [shape: f32[2,8,96], index: 2, kind: output, shape index: {}]
  %s3 = sld [smem:[#allocation0]]
  $region49: #{tpu_custom_call.1} parent=0
    _
  %s5 = ssub.s32 1, %s3
  %s6 = scalar_select 0, %s5, %s3
  $region1: #{tpu_custom_call.1} parent=0
    #allocation2 [shape = 'u8[8192]{0}', space=vmem, size = 0x2000, scoped, tag = 'input window, operand 0']
    #allocation3 [shape = 's32[2]{0}', space=sflag, size = 0x8, scoped, tag = 'scoped memory for tpu_custom_call.1']
    #allocation4 [shape = 's32[2]{0}', space=sflag, size = 0x8, scoped, tag = 'scoped memory for tpu_custom_call.1']
    #allocation5 [shape = 'u8[16384]{0}', space=vmem, size = 0x4000, scoped, tag = 'input window, operand 1, single buffered']
    #allocation6 [shape = 's32[1]{0}', space=sflag, size = 0x4, scoped, tag = 'scoped memory for tpu_custom_call.1']
    #allocation7 [shape = 'u8[8192]{0}', space=vmem, size = 0x2000, scoped, tag = 'output window, operand 0']
    %7 = vsyncpa [#allocation3], 0
    %s8 = scalar_lea.sflag [#allocation3], 1
    %9 = vsyncpa %s8, 0
    %10 = vsyncpa [#allocation6], 0
    %11 = vsyncpa [#allocation4], 0
    %s12 = scalar_lea.sflag [#allocation4], 1
    %13 = vsyncpa %s12, 0
    loop: start=0, step=1, limit=4
    $region2: #{tpu_custom_call.1} parent=1 // loop_pre_header
      _
    $region3: #{tpu_custom_call.1} parent=1 // loop_header
      %s15 = sphi 0, %s19
      %p16 = scmp.ge.s32.totalorder %s15, 4
      %s22 = sphi 0, %s34
      %s23 = sphi 0, %s30
      %s24 = sphi 0, %s22
      %s25 = sphi 0, %s23
      %s26 = sphi 0, %s24
      %s27 = sphi 0, %s25
      %s39 = sphi 0, %s41
      %s42 = sphi 0, %s39
      %s43 = sphi 0, %s42
      %s59 = sphi 0, %s43
      %s63 = sphi 0, %s63
      %s65 = sphi 0, %s63
      %s66 = sphi 0, %s65
      %s80 = sphi 0, %s66
      %s88 = sphi 0, %s90
      %s91 = sphi 0, %s88
      %s92 = sphi 0, %s91
      %s108 = sphi 0, %s92
    $region4: #{tpu_custom_call.1} parent=1 // loop_header_branch
      %18 = sbr.rel (%p16) target = $region8
    $region5: #{tpu_custom_call.1} parent=1 // loop_body
      %s20 = ssub.s32 %s15, 1
      %s21 = ssub.s32 %s15, 2
      %s28 = sadd.s32 1, %s23
      %p29 = scmp.ge.s32.totalorder %s28, 1
      %s30 = scalar_select %p29, 0, %s28
      %s31 = sadd.s32 1, %s22
      %s32 = scalar_select %p29, %s31, %s22
      %p33 = scmp.ge.s32.totalorder %s32, 2
      %s34 = scalar_select %p33, 0, %s32
      %s35 = ssub.s32 %s22, %s34
      %s36 = ssub.s32 %s23, %s30
      %s37 = sor.u32 %s35, %s36
      %p38 = scmp.eq.s32.totalorder %s37, 0
      %s40 = sadd.s32 %s39, 1
      %s41 = scalar_select %p38, %s39, %s40
      %p44 = pneg %p38
      %p45 = scmp.eq.s32.totalorder %s15, 1
      %p46 = por %p44, %p45
      %p47 = scmp.ne.s32.totalorder %s39, %s42
      %p48 = scmp.eq.s32.totalorder %s15, 0
      %p49 = por %p47, %p48
      %p50 = scmp.ne.s32.totalorder %s39, %s42
      %p51 = scmp.eq.s32.totalorder %s20, 1
      %p52 = por %p50, %p51
      %p53 = scmp.ne.s32.totalorder %s42, %s43
      %p54 = scmp.eq.s32.totalorder %s20, 0
      %p55 = por %p53, %p54
      %p56 = scmp.ne.s32.totalorder %s42, %s43
      %p57 = scmp.eq.s32.totalorder %s21, 1
      %p58 = por %p56, %p57
      %p60 = scmp.ne.s32.totalorder %s43, %s59
      %p61 = scmp.eq.s32.totalorder %s21, 0
      %p62 = por %p60, %p61
      %s64 = sadd.s32 %s63, 1
      %p67 = scmp.eq.s32.totalorder %s15, 1
      %p68 = scmp.ne.s32.totalorder %s63, %s65
      %p69 = scmp.eq.s32.totalorder %s15, 0
      %p70 = por %p68, %p69
      %p71 = scmp.ne.s32.totalorder %s63, %s65
      %p72 = scmp.eq.s32.totalorder %s20, 1
      %p73 = por %p71, %p72
      %p74 = scmp.ne.s32.totalorder %s65, %s66
      %p75 = scmp.eq.s32.totalorder %s20, 0
      %p76 = por %p74, %p75
      %p77 = scmp.ne.s32.totalorder %s65, %s66
      %p78 = scmp.eq.s32.totalorder %s21, 1
      %p79 = por %p77, %p78
      %p81 = scmp.ne.s32.totalorder %s66, %s80
      %p82 = scmp.eq.s32.totalorder %s21, 0
      %p83 = por %p81, %p82
      %s84 = ssub.s32 %s22, %s34
      %s85 = ssub.s32 %s23, %s30
      %s86 = sor.u32 %s84, %s85
      %p87 = scmp.eq.s32.totalorder %s86, 0
      %s89 = sadd.s32 %s88, 1
      %s90 = scalar_select %p87, %s88, %s89
      %p93 = pneg %p87
      %p94 = scmp.eq.s32.totalorder %s15, 1
      %p95 = por %p93, %p94
      %p96 = scmp.ne.s32.totalorder %s88, %s91
      %p97 = scmp.eq.s32.totalorder %s15, 0
      %p98 = por %p96, %p97
      %p99 = scmp.ne.s32.totalorder %s88, %s91
      %p100 = scmp.eq.s32.totalorder %s20, 1
      %p101 = por %p99, %p100
      %p102 = scmp.ne.s32.totalorder %s91, %s92
      %p103 = scmp.eq.s32.totalorder %s20, 0
      %p104 = por %p102, %p103
      %p105 = scmp.ne.s32.totalorder %s91, %s92
      %p106 = scmp.eq.s32.totalorder %s21, 1
      %p107 = por %p105, %p106
      %p109 = scmp.ne.s32.totalorder %s92, %s108
      %p110 = scmp.eq.s32.totalorder %s21, 0
      %p111 = por %p109, %p110
      %p112 = scmp.le.s32.totalorder 1, %s15
      %p113 = scmp.lt.s32.totalorder %s15, 3
      %p114 = pnand %p112, %p113
      %p115 = pneg %p114
      // Predicated region
      $region9: #{tpu_custom_call.1} parent=5 // pred_check
        _
      $region10: #{tpu_custom_call.1} parent=5 // pred_check_branch
        %117 = sbr.rel (%p114) target = $region12
      $region11: #{tpu_custom_call.1} parent=5 // pred_region
        %s118 = ssub.s32 %s15, 1
        // Predicated region
        $region13: #{tpu_custom_call.1} parent=11 // pred_check
          %p119 = pneg %p76
        $region14: #{tpu_custom_call.1} parent=11 // pred_check_branch
          %121 = sbr.rel (%p119) target = $region16
        $region15: #{tpu_custom_call.1} parent=11 // pred_region
          %s123 = ssub.s32 512, 512
          %124 = vsyncadd [#allocation6], %s123
          %s125 = sshll.u32 [#allocation5], 4
          %s126 = int_to_ptr.vmem [resolvable:$true] %s125
          %131 = dma.hbm_to_vmem [thread:$0]  %s1, 512, %s126, [#allocation6], 128, 128, 8
        $region16: #{tpu_custom_call.1} parent=11 // pred_fallthru
          _
      $region12: #{tpu_custom_call.1} parent=5 // pred_fallthru
        _
      %p132 = scmp.lt.s32.totalorder %s15, 2
      // Predicated region
      $region17: #{tpu_custom_call.1} parent=5 // pred_check
        %p133 = pneg %p132
      $region18: #{tpu_custom_call.1} parent=5 // pred_check_branch
        %135 = sbr.rel (%p133) target = $region20
      $region19: #{tpu_custom_call.1} parent=5 // pred_region
        // Predicated region
        $region21: #{tpu_custom_call.1} parent=19 // pred_check
          %p136 = pneg %p49
        $region22: #{tpu_custom_call.1} parent=19 // pred_check_branch
          %138 = sbr.rel (%p136) target = $region24
        $region23: #{tpu_custom_call.1} parent=19 // pred_region
          %s139 = sand.u32 %s39, 1
          %s140 = scalar_lea.sflag [#allocation3], %s139
          %s141 = sand.u32 %s39, 1
          %s142 = smul.addr %s141, 8
          %s143 = scalar_lea.vmem [#allocation2], %s142
          %s145 = ssub.s32 128, 128
          %146 = vsyncadd %s140, %s145
          %s147 = sadd.s32 %s23, %s22
          %s148 = smul.addr %s147, 128
          %s149 = scalar_lea.hbm %s0, %s148
          %s151 = sshll.u32 %s143, 4
          %s152 = int_to_ptr.vmem [resolvable:$true] %s151
          %154 = dma.hbm_to_vmem [thread:$0]  %s149, 128, %s152, %s140
        $region24: #{tpu_custom_call.1} parent=19 // pred_fallthru
          _
      $region20: #{tpu_custom_call.1} parent=5 // pred_fallthru
        _
      %p155 = scmp.le.s32.totalorder 1, %s15
      %p156 = scmp.lt.s32.totalorder %s15, 3
      %p157 = pnand %p155, %p156
      %p158 = pneg %p157
      // Predicated region
      $region25: #{tpu_custom_call.1} parent=5 // pred_check
        _
      $region26: #{tpu_custom_call.1} parent=5 // pred_check_branch
        %160 = sbr.rel (%p157) target = $region28
      $region27: #{tpu_custom_call.1} parent=5 // pred_region
        %s161 = ssub.s32 %s15, 1
        %s162 = sand.u32 %s42, 1
        %s163 = scalar_lea.sflag [#allocation3], %s162
        %s164 = sand.u32 %s42, 1
        %s165 = smul.addr %s164, 8
        %s166 = scalar_lea.vmem [#allocation2], %s165
        // Predicated region
        $region29: #{tpu_custom_call.1} parent=27 // pred_check
          %p167 = pneg %p55
        $region30: #{tpu_custom_call.1} parent=27 // pred_check_branch
          %169 = sbr.rel (%p167) target = $region32
        $region31: #{tpu_custom_call.1} parent=27 // pred_region
          %170 = dma.done %s163, 128
        $region32: #{tpu_custom_call.1} parent=27 // pred_fallthru
          _
        // Predicated region
        $region33: #{tpu_custom_call.1} parent=27 // pred_check
          %p171 = pneg %p76
        $region34: #{tpu_custom_call.1} parent=27 // pred_check_branch
          %173 = sbr.rel (%p171) target = $region36
        $region35: #{tpu_custom_call.1} parent=27 // pred_region
          %174 = dma.done [#allocation6], 512
        $region36: #{tpu_custom_call.1} parent=27 // pred_fallthru
          _
        %s175 = sand.u32 %s42, 1
        %s176 = scalar_lea.sflag [#allocation3], %s175
        %s177 = sand.u32 %s42, 1
        %s178 = smul.addr %s177, 8
        %s179 = scalar_lea.vmem [#allocation2], %s178
        %p180 = pneg %p55
        %p181 = pneg %p52
        %p182 = pneg %p76
        %p183 = pneg %p73
        %p184 = pneg %p104
        %p185 = pneg %p101
        %s186 = sand.u32 %s91, 1
        %s187 = scalar_lea.sflag [#allocation4], %s186
        %s188 = sand.u32 %s91, 1
        %s189 = smul.addr %s188, 8
        %s190 = scalar_lea.vmem [#allocation7], %s189
        %v191 = vld [vmem:[%s166] sm:$0xff]
        %v192 = vld [vmem:[#allocation5] sm:$0xff]
        %v193 = vld [vmem:[#allocation5 + $0x8] sm:$0xff]
        %v194 = vld [vmem:[#allocation5 + $0x10] sm:$0xff]
        %v195 = vld [vmem:[#allocation5 + $0x18] sm:$0xff]
        %vm196 = vcmask 261120
        %v198 = vsel %vm196, %v191, 0
        %200 = vmatprep.subr.mxu0 0.0
        %201 = vmatpush1.msra.mxu0 %v192
        %202 = vmatprep.subr.mxu0 0.0
        %203 = vmatpush1.msra.mxu0 %v193
        %204 = vmatprep.subr.mxu0 0.0
        %205 = vmatpush1.msra.mxu0 %v194
        %206 = vmatprep.subr.mxu0 0.0
        %207 = vmatpush1.msra.mxu0 %v195
        %208 = vmatprep.subr.mxu0 0.0
        %209 = vmatpush1.msra.mxu0 0.0
        %210 = vmatprep.subr.mxu0 0.0
        %211 = vmatpush1.msra.mxu0 0.0
        %212 = vmatprep.subr.mxu0 0.0
        %213 = vmatpush1.msra.mxu0 0.0
        %214 = vmatprep.subr.mxu0 0.0
        %215 = vmatpush1.msra.mxu0 0.0
        %216 = vmatprep.subr.mxu0 0.0
        %217 = vmatpush1.msra.mxu0 0.0
        %218 = vmatprep.subr.mxu0 0.0
        %219 = vmatpush1.msra.mxu0 0.0
        %220 = vmatprep.subr.mxu0 0.0
        %221 = vmatpush1.msra.mxu0 0.0
        %222 = vmatprep.subr.mxu0 0.0
        %223 = vmatpush1.msra.mxu0 0.0
        %224 = vmatprep.subr.mxu0 0.0
        %225 = vmatpush1.msra.mxu0 0.0
        %226 = vmatprep.subr.mxu0 0.0
        %227 = vmatpush1.msra.mxu0 0.0
        %228 = vmatprep.subr.mxu0 0.0
        %229 = vmatpush1.msra.mxu0 0.0
        %230 = vmatprep.subr.mxu0 0.0
        %231 = vmatpush1.msra.mxu0 0.0
        %232 = vmatprep.subr.mxu0 0.0
        %233 = vmatpush1.msra.mxu0 0.0
        %234 = vmatprep.subr.mxu0 0.0
        %235 = vmatpush1.msra.mxu0 0.0
        %236 = vmatprep.subr.mxu0 0.0
        %237 = vmatpush1.msra.mxu0 0.0
        %238 = vmatprep.subr.mxu0 0.0
        %239 = vmatpush1.msra.mxu0 0.0
        %240 = vmatprep.subr.mxu0 0.0
        %241 = vmatpush1.msra.mxu0 0.0
        %242 = vmatprep.subr.mxu0 0.0
        %243 = vmatpush1.msra.mxu0 0.0
        %244 = vmatprep.subr.mxu0 0.0
        %245 = vmatpush1.msra.mxu0 0.0
        %246 = vmatprep.subr.mxu0 0.0
        %247 = vmatpush1.msra.mxu0 0.0
        %248 = vmatprep.subr.mxu0 0.0
        %249 = vmatpush1.msra.mxu0 0.0
        %250 = vmatprep.subr.mxu0 0.0
        %251 = vmatpush1.msra.mxu0 0.0
        %252 = vmatprep.subr.mxu0 0.0
        %253 = vmatpush1.msra.mxu0 0.0
        %254 = vmatprep.subr.mxu0 0.0
        %255 = vmatpush1.msra.mxu0 0.0
        %256 = vmatprep.subr.mxu0 0.0
        %257 = vmatpush1.msra.mxu0 0.0
        %258 = vmatprep.subr.mxu0 0.0
        %259 = vmatpush1.msra.mxu0 0.0
        %260 = vmatprep.subr.mxu0 0.0
        %261 = vmatpush1.msra.mxu0 0.0
        %262 = vmatprep.subr.mxu0 0.0
        %263 = vmatpush1.msra.mxu0 0.0
        %264 = vmatprep.mubr.f32.mxu0 0.0
        %265 = vmatmul.mubr.f32.gmra.mrb[0].mxu0 %v198
        %v266 = vpop.f32.mrb[0].mxu0
        %v267 = vadd.f32 0.0, %v266
        %v268 = vpop.f32.mrb[0].mxu0
        %269 = vdwg.mxu0
        %vm270 = vcmask 785408
        %271 = vst.msk [vmem:[%s190] sm:$0xff] %vm270, %v267
        %s272 = sand.u32 %s91, 1
        %s273 = scalar_lea.sflag [#allocation4], %s272
        %s274 = sand.u32 %s91, 1
        %s275 = smul.addr %s274, 8
        %s276 = scalar_lea.vmem [#allocation7], %s275
        // Predicated region
        $region37: #{tpu_custom_call.1} parent=27 // pred_check
          %p277 = pneg %p101
        $region38: #{tpu_custom_call.1} parent=27 // pred_check_branch
          %279 = sbr.rel (%p277) target = $region40
        $region39: #{tpu_custom_call.1} parent=27 // pred_region
          %s281 = ssub.s32 128, 128
          %282 = vsyncadd %s273, %s281
          %s283 = sadd.s32 %s25, %s24
          %s284 = smul.addr %s283, 128
          %s285 = scalar_lea.hbm %s2, %s284
          %s287 = sshll.u32 %s276, 4
          %s288 = int_to_ptr.vmem [resolvable:$true] %s287
          %290 = dma.vmem_to_hbm [thread:$0]  %s288, 128, %s285, %s273
        $region40: #{tpu_custom_call.1} parent=27 // pred_fallthru
          _
      $region28: #{tpu_custom_call.1} parent=5 // pred_fallthru
        _
      %p291 = scmp.le.s32.totalorder 2, %s15
      // Predicated region
      $region41: #{tpu_custom_call.1} parent=5 // pred_check
        %p292 = pneg %p291
      $region42: #{tpu_custom_call.1} parent=5 // pred_check_branch
        %294 = sbr.rel (%p292) target = $region44
      $region43: #{tpu_custom_call.1} parent=5 // pred_region
        %s295 = ssub.s32 %s15, 2
        // Predicated region
        $region45: #{tpu_custom_call.1} parent=43 // pred_check
          %p296 = pneg %p107
        $region46: #{tpu_custom_call.1} parent=43 // pred_check_branch
          %298 = sbr.rel (%p296) target = $region48
        $region47: #{tpu_custom_call.1} parent=43 // pred_region
          %s299 = sand.u32 %s92, 1
          %s300 = scalar_lea.sflag [#allocation4], %s299
          %s301 = sand.u32 %s92, 1
          %s302 = smul.addr %s301, 8
          %s303 = scalar_lea.vmem [#allocation7], %s302
          %304 = dma.done %s300, 128
        $region48: #{tpu_custom_call.1} parent=43 // pred_fallthru
          _
      $region44: #{tpu_custom_call.1} parent=5 // pred_fallthru
        _
    $region6: #{tpu_custom_call.1} parent=1 // loop_footer
      %s19 = sadd.s32 1, %s15
    $region7: #{tpu_custom_call.1} parent=1 // loop_footer_branch
      %14 = sbr.rel target = $region3
    $region8: #{tpu_custom_call.1} parent=1 // loop_exit
      _
    %305 = vsyncpa [#allocation3], 1
    %s306 = scalar_lea.sflag [#allocation3], 1
    %307 = vsyncpa %s306, 1
    %308 = vsyncpa [#allocation6], 1
    %309 = vsyncpa [#allocation4], 1
    %s310 = scalar_lea.sflag [#allocation4], 1
    %311 = vsyncpa %s310, 1

</llo_original>
